<compile_context>
chip_gen: v7x
topology: tpu7x:2x2x1
jax: 0.10.0
libtpu: 0.0.40
codegen_flags: <defaults>
</compile_context>

<pallas_src>
import jax
import jax.numpy as jnp
import numpy as np
from jax.experimental import pallas as pl
from jax.experimental.pallas import tpu as pltpu


# ---------------------------------------------------------------------------
# Kernels
# ---------------------------------------------------------------------------
def _bg_broadcast_kernel(pattern_ref, out_ref):
    """Full-coverage specialization: every pixel == fill color.

    pattern_ref: VMEM (1, W*4) f32, RGBA fill color tiled along the lane axis.
    out_ref:     VMEM (TH, W*4) f32, RGBA interleaved along the lane axis.
    """
    th = out_ref.shape[0]
    w4 = out_ref.shape[1]
    out_ref[...] = jnp.broadcast_to(pattern_ref[...], (th, w4))


def _make_bg_coverage_kernel(pts_np):
    """General path: 2x2 box-sample point-in-convex-quad coverage.

    Edge cross products are affine in (x, y); coefficients (and the per
    sub-sample offsets) are folded in as Python float constants, so per
    sub-sample each edge test is one add + two compares.
    """
    # cross_e(x, y) = (bx-ax)*(y-ay) - (by-ay)*(x-ax) = A_e*y + B_e*x + C_e
    A, B, C = [], [], []
    for e in range(4):
        ax, ay = float(pts_np[e, 0]), float(pts_np[e, 1])
        bx, by = float(pts_np[(e + 1) % 4, 0]), float(pts_np[(e + 1) % 4, 1])
        a_e = bx - ax
        b_e = -(by - ay)
        A.append(a_e)
        B.append(b_e)
        C.append(-a_e * ay - b_e * ax)

    subs = (0.25, 0.75)  # num_samples_x = num_samples_y = 2

    def kernel(pattern_ref, out_ref):
        th, w4 = out_ref.shape
        row0 = pl.program_id(0) * th
        li = jax.lax.broadcasted_iota(jnp.int32, (th, w4), 1)
        yi = (jax.lax.broadcasted_iota(jnp.int32, (th, w4), 0)
              + row0).astype(jnp.float32)
        xi = (li // 4).astype(jnp.float32)  # pixel x index (RGBA interleaved lanes)

        # Per-edge affine base plane at the pixel corner; sub-sample shifts are
        # compile-time scalars added on top.
        base = [A[e] * yi + B[e] * xi + C[e] for e in range(4)]

        cnt = jnp.zeros((th, w4), jnp.int32)
        for dy in subs:
            for dx in subs:
                all_pos = None
                all_neg = None
                for e in range(4):
                    cr = base[e] + (A[e] * dy + B[e] * dx)
                    p = cr >= 0.0
                    n = cr <= 0.0
                    all_pos = p if all_pos is None else (all_pos & p)
                    all_neg = n if all_neg is None else (all_neg & n)
                cnt = cnt + (all_pos | all_neg).astype(jnp.int32)
        cov = cnt.astype(jnp.float32) * 0.25

        out_ref[...] = cov * pattern_ref[...]

    return kernel


# ---------------------------------------------------------------------------
# Trace-time geometry helpers (numpy; zero runtime cost)
# ---------------------------------------------------------------------------
def _point_in_convex_quad(pts, x, y):
    all_pos = True
    all_neg = True
    for e in range(4):
        ax, ay = pts[e]
        bx, by = pts[(e + 1) % 4]
        cr = (bx - ax) * (y - ay) - (by - ay) * (x - ax)
        all_pos &= cr >= 0.0
        all_neg &= cr <= 0.0
    return all_pos or all_neg


def _fully_covers(pts, canvas_width, canvas_height):
    """All 2x2 sub-samples lie in [0.25, W-0.25] x [0.25, H-0.25]; since the
    quad is convex, containment of that box's 4 corners implies full coverage."""
    w = float(canvas_width)
    h = float(canvas_height)
    corners = [(0.25, 0.25), (w - 0.25, 0.25), (w - 0.25, h - 0.25), (0.25, h - 0.25)]
    return all(_point_in_convex_quad(pts, x, y) for x, y in corners)


def _choose_row_tile(canvas_height, w4):
    """Pick the row tile: biggest tile (<= ~4 MiB) that is a multiple of 8 and
    preferably divides H exactly (so no ragged tail block)."""
    row_bytes = w4 * 4
    target_block_bytes = 4 * 1024 * 1024
    max_rows = max(8, target_block_bytes // max(row_bytes, 1))
    if canvas_height <= max_rows:
        return canvas_height  # single full-height block
    t = (max_rows // 8) * 8
    while t >= 8:
        if canvas_height % t == 0:
            return t
        t -= 8
    # No multiple-of-8 divisor: ragged tail block (Pallas masks the writeback).
    return (max_rows // 8) * 8


# ---------------------------------------------------------------------------
# Wrapper
# ---------------------------------------------------------------------------
def background_forward(color, canvas_width, canvas_height,
                       force_coverage_path=False):
    """Replicates background.forward(): render the full-canvas rectangle filled
    with cat(color, [1.0]). Returns an (H, W, 4) float32 RGBA image."""
    w = float(canvas_width)
    h = float(canvas_height)
    # obb as in background.__init__; render_rectangle appends p3 = p0 + p2 - p1
    p0 = np.array([-1.0, -1.0])
    p1 = np.array([w + 1.0, -1.0])
    p2 = np.array([w + 1.0, h + 1.0])
    p3 = p0 + p2 - p1
    pts = np.stack([p0, p1, p2, p3]).astype(np.float64)  # (4, 2), trace-time constant

    fill_color = jnp.concatenate(
        [color.astype(jnp.float32), jnp.ones((1,), jnp.float32)])  # (4,) RGBA

    w4 = 4 * canvas_width
    # (1, W*4) RGBA-interleaved fill pattern; O(W) work outside the kernel.
    fill_pattern = jnp.tile(fill_color, (1, canvas_width))

    th = _choose_row_tile(canvas_height, w4)
    n_blocks = pl.cdiv(canvas_height, th)

    if _fully_covers(pts, canvas_width, canvas_height) and not force_coverage_path:
        kernel = _bg_broadcast_kernel  # coverage == 1 everywhere: pure broadcast-store
    else:
        kernel = _make_bg_coverage_kernel(pts)

    out_flat = pl.pallas_call(
        kernel,
        out_shape=jax.ShapeDtypeStruct((canvas_height, w4), jnp.float32),
        grid=(n_blocks,),
        in_specs=[pl.BlockSpec((1, w4), lambda i: (0, 0))],
        out_specs=pl.BlockSpec((th, w4), lambda i: (i, 0)),
        compiler_params=pltpu.CompilerParams(
            dimension_semantics=("parallel",),
            vmem_limit_bytes=32 * 1024 * 1024),
    )(fill_pattern)

    # Metadata-only reshape: (H, W*4) row-major == (H, W, 4) RGBA HWC.
    return out_flat.reshape(canvas_height, canvas_width, 4)


if __name__ == "__main__":
    canvas_width = 16
    canvas_height = 16

    key = jax.random.PRNGKey(0)
    # deterministic "parameter": the background's color (3,), as in color_init
    color = jax.random.uniform(key, (3,), dtype=jnp.float32)

    img = background_forward(color, canvas_width, canvas_height)
    img = jax.block_until_ready(img)

    # Reference: the background rectangle covers every pixel, so every pixel
    # equals cat(color, 1.0).
    expected = jnp.broadcast_to(
        jnp.concatenate([color, jnp.ones((1,), jnp.float32)]),
        (canvas_height, canvas_width, 4))
    assert img.shape == (canvas_height, canvas_width, 4)
    assert jnp.allclose(img, expected, atol=1e-6)

    # Also exercise the general coverage path (must give the same full-coverage
    # result for the background rectangle).
    img2 = background_forward(color, canvas_width, canvas_height,
                              force_coverage_path=True)
    img2 = jax.block_until_ready(img2)
    assert jnp.allclose(img2, expected, atol=1e-6)

    print("KERNEL_OK")
</pallas_src>

<mosaic_0001>
module attributes {stable_mosaic.version = 11 : i64} {
  func.func @_bg_broadcast_kernel(%arg0: i32, %arg1: memref<1x64xf32, #tpu.memory_space<vmem>>, %arg2: memref<16x64xf32, #tpu.memory_space<vmem>>) attributes {dimension_semantics = [#tpu.dimension_semantics<parallel>], iteration_bounds = array<i64: 1>, scalar_prefetch = 0 : i64, scratch_operands = 0 : i64, tpu.core_type = #tpu.core_type<tc>, window_params = [{pipeline_mode = #tpu.pipeline_mode<synchronous>, transform_indices = @transform_0, window_bounds = array<i64: 1, 64>}, {transform_indices = @transform_1, window_bounds = array<i64: 16, 64>}]} {
    %c0 = arith.constant 0 : index
    %c0_0 = arith.constant 0 : index
    %0 = vector.load %arg1[%c0, %c0_0] : memref<1x64xf32, #tpu.memory_space<vmem>>, vector<1x64xf32>
    %1 = vector.shape_cast %0 : vector<1x64xf32> to vector<1x64xf32>
    %2 = vector.broadcast %1 : vector<1x64xf32> to vector<16x64xf32>
    %c0_1 = arith.constant 0 : index
    %c0_2 = arith.constant 0 : index
    %3 = vector.load %arg2[%c0_1, %c0_2] : memref<16x64xf32, #tpu.memory_space<vmem>>, vector<16x64xf32>
    tpu.vector_store %arg2[%c0_1, %c0_2], %2 {strides = array<i32>} : memref<16x64xf32, #tpu.memory_space<vmem>>, vector<16x64xf32>,
    return
  }
  func.func @transform_0(%arg0: i32) -> (i32, i32) {
    %c0_i32 = arith.constant 0 : i32
    %c0_i32_0 = arith.constant 0 : i32
    %c0_i32_1 = arith.constant 0 : i32
    return %c0_i32, %c0_i32_0 : i32, i32
  }
  func.func @transform_1(%arg0: i32) -> (i32, i32) {
    %c0_i32 = arith.constant 0 : i32
    %c0_i32_0 = arith.constant 0 : i32
    return %arg0, %c0_i32 : i32, i32
  }
}

</mosaic_0001>

<llo_original>
// kernel: tpu_custom_call.1
$region0: #{tpu_custom_call.1}
  #allocation0 [shape = 'u32[]', space=smem, size = 0x4, offset = 0x4, fixed_abs, tag = 'smem constant byte address 0x4 - core index']
  #allocation1 [shape = 'u32[144,128]{1,0:T(1,128)}', space=vmem, size = 0x12000, scoped, tag = 'internal scratch']
  %s0 = inlined_call_operand.hbm [shape: f32[1,64], index: 0, kind: input, shape index: {}]
  %s1 = inlined_call_operand.hbm [shape: f32[16,64], index: 1, kind: output, shape index: {}]
  %s2 = sld [smem:[#allocation0]]
  $region18: #{tpu_custom_call.1} parent=0
    _
  %s4 = ssub.s32 1, %s2
  %s5 = scalar_select 0, %s4, %s2
  $region1: #{tpu_custom_call.1} parent=0
    #allocation2 [shape = 'u8[512]{0}', space=vmem, size = 0x400, scoped, tag = 'input window, operand 0, single buffered']
    #allocation3 [shape = 's32[1]{0}', space=sflag, size = 0x4, scoped, tag = 'scoped memory for tpu_custom_call.1']
    #allocation4 [shape = 's32[1]{0}', space=sflag, size = 0x4, scoped, tag = 'scoped memory for tpu_custom_call.1']
    #allocation5 [shape = 'u8[8192]{0}', space=vmem, size = 0x2000, scoped, tag = 'output window, operand 0, single buffered']
    %6 = vsyncpa [#allocation3], 0
    %7 = vsyncpa [#allocation4], 0
    // Predicated region
    $region2: #{tpu_custom_call.1} parent=1 // pred_check
      _
    $region3: #{tpu_custom_call.1} parent=1 // pred_check_branch
      %9 = sbr.rel (0) target = $region5
    $region4: #{tpu_custom_call.1} parent=1 // pred_region
      %s11 = ssub.s32 16, 16
      %12 = vsyncadd [#allocation3], %s11
      %s14 = sshll.u32 [#allocation2], 4
      %s15 = int_to_ptr.vmem [resolvable:$true] %s14
      %17 = dma.hbm_to_vmem [thread:$0]  %s0, 16, %s15, [#allocation3]
    $region5: #{tpu_custom_call.1} parent=1 // pred_fallthru
      _
    // Predicated region
    $region6: #{tpu_custom_call.1} parent=1 // pred_check
      _
    $region7: #{tpu_custom_call.1} parent=1 // pred_check_branch
      %19 = sbr.rel (0) target = $region9
    $region8: #{tpu_custom_call.1} parent=1 // pred_region
      %20 = dma.done [#allocation3], 16
    $region9: #{tpu_custom_call.1} parent=1 // pred_fallthru
      _
    %v21 = vld [vmem:[#allocation2] sm:$0x1]
    %v23 = vlaneseq
    %v24 = vshrl.u32 %v23, 7
    %v25 = vsub.s32 0, %v24
    %v26 = vrot.slane %v21, %v25
    %vm28 = vcmask 523264
    %29 = vst.msk [vmem:[#allocation5] sm:$0xff] %vm28, %v26
    %30 = vst.msk [vmem:[#allocation5 + $0x8] sm:$0xff] %vm28, %v26
    // Predicated region
    $region10: #{tpu_custom_call.1} parent=1 // pred_check
      _
    $region11: #{tpu_custom_call.1} parent=1 // pred_check_branch
      %32 = sbr.rel (0) target = $region13
    $region12: #{tpu_custom_call.1} parent=1 // pred_region
      %s34 = ssub.s32 256, 256
      %35 = vsyncadd [#allocation4], %s34
      %s36 = sshll.u32 [#allocation5], 4
      %s37 = int_to_ptr.vmem [resolvable:$true] %s36
      %42 = dma.vmem_to_hbm [thread:$0]  %s37, 256, %s1, [#allocation4], 128, 128, 8
    $region13: #{tpu_custom_call.1} parent=1 // pred_fallthru
      _
    // Predicated region
    $region14: #{tpu_custom_call.1} parent=1 // pred_check
      _
    $region15: #{tpu_custom_call.1} parent=1 // pred_check_branch
      %44 = sbr.rel (0) target = $region17
    $region16: #{tpu_custom_call.1} parent=1 // pred_region
      %45 = dma.done [#allocation4], 256
    $region17: #{tpu_custom_call.1} parent=1 // pred_fallthru
      _
    %46 = vsyncpa [#allocation3], 1
    %47 = vsyncpa [#allocation4], 1

</llo_original>
